<compile_context>
chip_gen: v5e
topology: v5e:2x2
jax: 0.10.0
libtpu: 0.0.40
codegen_flags: <defaults>
</compile_context>

<pallas_src>
import jax
import jax.numpy as jnp
from jax import lax
from jax.experimental import pallas as pl
from jax.experimental.pallas import tpu as pltpu  # noqa: F401  (TPU backend)

# ----------------------------- configuration --------------------------------
B = 2            # batch
H = W = 32       # image spatial size
C = 3            # RGB channels
P = 8            # patch size
NP = (H // P) * (W // P)       # image patches per sample = 16
K = P * P * C                  # flattened patch dim = 192
D = 32           # embedding dim ("extracted feature" dim)
GRID_SIZE = 4    # prompt-point grid (grid_size in the yaml config)
NPTS = GRID_SIZE * GRID_SIZE   # prompt points per sample = 16
M = 3            # masks predicted per point
HM = WM = 8      # low-res mask resolution
S = HM * WM      # mask spatial size = 64
MS = M * S       # flattened mask dim = 192
NUM_QUERIES = 8  # num_queries in the yaml config

NROWS_Q = B * NPTS             # 32 query rows across the whole batch
OUT_W = 128                    # lane-dense packed output width

IOU_PAD = 128                  # iou head lives at lanes [0:M]; mask logits at [IOU_PAD:IOU_PAD+MS]
HEAD_W = IOU_PAD + MS          # 320 fused-head width (both slices start 128-aligned)
HEAD_ROWS = 40                 # >= D + 1 rows (weights + bias), multiple of 8
PE_ROWS = 40                   # >= D + M rows (patch weight^T + seg^T), multiple of 8

IOU_THRESH = 0.7
STAB_MASK_THRESH = 0.0
STAB_OFFSET = 1.0
STAB_THRESH = 0.9


# ------------------------------ Pallas kernel --------------------------------
def sam_fused_kernel(xk_ref, ptb_ref, head_ref, pe_ref, out_ref):
    """Single-step fused kernel over the whole batch.

      pooled = mean_patch_rows @ Wp^T            (patch-embed, mean pre-commuted)
      q      = tanh(ptemb(+bp) + pooled)         (per-point features)
      head   = q @ [W_iou | 0 | W_mask] + b      (fused, 128-lane-aligned head)
      counts = [[logits>hi];[logits>lo]] @ SEG^T (one MXU segmented reduction)
      stab   = inter / max(union, 1)             (exact divide)
      out    = [q | iou | stab | 0-pad]          (lane-dense 128 slab)
    """
    f32 = jnp.float32
    bf16 = jnp.bfloat16
    dnt = (((1,), (1,)), ((), ()))          # contract last dims: A @ B^T

    # slab slices (all sublane-aligned starts: 0 and 32)
    wp_t = pe_ref[0:D, :]                          # (D, K)      bf16
    seg_t = pe_ref[D:D + M, :]                     # (M, MS)     bf16
    w_head = head_ref[0:D, :]                      # (D, HEAD_W) bf16
    b_head = head_ref[D:D + 1, :].astype(f32)      # (1, HEAD_W)

    # per-point pooled features: pre-broadcast mean patch through the embedding
    pooled = lax.dot_general(xk_ref[...], wp_t, dnt,
                             preferred_element_type=f32)          # (NROWS_Q, D)
    q = jnp.tanh(ptb_ref[...] + pooled)                           # (NROWS_Q, D) f32

    # fused mask-logit + IoU head (iou at lanes 0..M-1, mask logits at 128..319)
    head = jnp.dot(q.astype(bf16), w_head,
                   preferred_element_type=f32) + b_head           # (NROWS_Q, HEAD_W)
    iou = head[:, 0:M]                                            # (NROWS_Q, M)
    mlogits = head[:, IOU_PAD:IOU_PAD + MS]                       # (NROWS_Q, MS)

    # stability score: one MXU segmented reduction for inter and union together
    hi = STAB_MASK_THRESH + STAB_OFFSET
    lo = STAB_MASK_THRESH - STAB_OFFSET
    stacked = jnp.concatenate([mlogits > hi, mlogits > lo],
                              axis=0).astype(bf16)                # (2*NROWS_Q, MS)
    counts = lax.dot_general(stacked, seg_t, dnt,
                             preferred_element_type=f32)          # (2*NROWS_Q, M)
    inter = counts[0:NROWS_Q, :]
    union = counts[NROWS_Q:2 * NROWS_Q, :]
    # union >= inter >= 0; if union == 0 then inter == 0, so max(union,1) is a
    # safe guard.  Exact divide (stab is thresholded against 0.9 downstream).
    stab = inter / jnp.maximum(union, 1.0)

    pad = jnp.zeros((NROWS_Q, OUT_W - D - 2 * M), f32)
    out_ref[...] = jnp.concatenate([q, iou, stab, pad], axis=-1)  # (NROWS_Q, 128)


def run_sam_head(xk, ptb, head_slab, pe_slab):
    args = (xk, ptb, head_slab, pe_slab)
    flops = 2 * (NROWS_Q * K * D            # patch embedding of mean rows
                 + NROWS_Q * D * HEAD_W     # fused iou+mask head
                 + 2 * NROWS_Q * MS * M)    # fused stability segmented reduction
    transcendentals = NROWS_Q * D           # tanh
    bytes_accessed = int(sum(a.size * a.dtype.itemsize for a in args)
                         + NROWS_Q * OUT_W * 4)
    # Single invocation, no grid: whole problem fits trivially in VMEM on
    # v5e/v6e/v7x; a grid would only add per-step overhead at this size.
    return pl.pallas_call(
        sam_fused_kernel,
        out_shape=jax.ShapeDtypeStruct((NROWS_Q, OUT_W), jnp.float32),
        cost_estimate=pl.CostEstimate(flops=flops,
                                      transcendentals=transcendentals,
                                      bytes_accessed=bytes_accessed),
    )(*args)


# ------------------------------- JAX glue ------------------------------------
def patch_means(rgb_uint8):
    """uint8 NHWC image -> per-batch mean flattened patch [B, K] (img/255)."""
    x = rgb_uint8.astype(jnp.float32) / 255.0
    x = x.reshape(B, H // P, P, W // P, P, C)
    x = x.transpose(0, 1, 3, 2, 4, 5).reshape(B, NP, K)
    return jnp.mean(x, axis=1)                                   # (B, K)


def build_point_prompts(w_pt, b_pt):
    """Same point grid as the PyTorch module (0.5 + i/grid_size * 224)."""
    xy = []
    for i in range(GRID_SIZE):
        cx = 0.5 + i / GRID_SIZE * 224.0
        for j in range(GRID_SIZE):
            cy = 0.5 + j / GRID_SIZE * 224.0
            xy.append([cx, cy])
    points = jnp.asarray(xy, dtype=jnp.float32)                  # (NPTS, 2)
    labels = jnp.ones((NPTS, 1), dtype=jnp.float32)              # point_labels
    pt_in = jnp.concatenate([points / 224.0, labels], axis=-1)   # (NPTS, 3)
    return pt_in @ w_pt + b_pt                                   # (NPTS, D)


def build_head_slab(w_iou, b_iou, w_mask, b_mask):
    """[w_iou | 0-pad to lane 128 | w_mask] weights + bias row, bf16 slab."""
    zpad_w = jnp.zeros((D, IOU_PAD - M), jnp.float32)
    zpad_b = jnp.zeros((1, IOU_PAD - M), jnp.float32)
    w_head = jnp.concatenate([w_iou, zpad_w, w_mask], axis=1)    # (D, HEAD_W)
    b_head = jnp.concatenate([b_iou, zpad_b, b_mask], axis=1)    # (1, HEAD_W)
    slab = jnp.concatenate([w_head, b_head], axis=0)             # (D+1, HEAD_W)
    slab = jnp.pad(slab, ((0, HEAD_ROWS - (D + 1)), (0, 0)))
    return slab.astype(jnp.bfloat16)


def build_pe_slab(w_patch):
    """Patch-embed weight (transposed) + transposed segment matrix, bf16 slab."""
    seg_t = (jnp.arange(MS)[None, :] // S
             == jnp.arange(M)[:, None]).astype(jnp.float32)      # (M, MS)
    slab = jnp.concatenate([w_patch.T, seg_t], axis=0)           # (D+M, K)
    slab = jnp.pad(slab, ((0, PE_ROWS - (D + M)), (0, 0)))
    return slab.astype(jnp.bfloat16)


def postprocess(pred_iou, stab, features):
    """Fixed-shape version of get_predictions_given_embeddings_and_queries.

    pred_iou : [B, NPTS, M], stab : [B, NPTS, M], features : [B, NPTS, D]
    Returns iou_ [B, NUM_QUERIES], features [B, NUM_QUERIES, D].
    """
    best = jnp.argmax(pred_iou, axis=-1)                                # [B,NPTS]
    iou_best = jnp.take_along_axis(pred_iou, best[..., None], axis=-1)[..., 0]
    stab_best = jnp.take_along_axis(stab, best[..., None], axis=-1)[..., 0]

    valid = (iou_best > IOU_THRESH) & (stab_best > STAB_THRESH)         # [B,NPTS]
    count = jnp.sum(valid, axis=-1)                                     # [B]

    idx = jnp.arange(NPTS, dtype=jnp.float32)
    # >= num_queries valid: take top-k by stability (descending)
    key_sorted = jnp.where(valid, -stab_best, jnp.inf)
    # <  num_queries valid: keep original point order of valid entries, pad 0
    key_orig = jnp.where(valid, idx[None, :], jnp.float32(NPTS + 1))
    key = jnp.where((count >= NUM_QUERIES)[:, None], key_sorted, key_orig)

    order = jnp.argsort(key, axis=-1)[:, :NUM_QUERIES]                  # [B,nq]
    sel_valid = jnp.take_along_axis(valid, order, axis=-1)
    iou_out = jnp.where(sel_valid,
                        jnp.take_along_axis(iou_best, order, axis=-1), 0.0)
    feat_sel = jax.vmap(lambda f, o: f[o])(features, order)             # [B,nq,D]
    feat_out = jnp.where(sel_valid[..., None], feat_sel, 0.0)
    return iou_out, feat_out


def init_params(key):
    ks = jax.random.split(key, 6)
    w_patch = 0.05 * jax.random.normal(ks[0], (K, D), jnp.float32)
    b_patch = jnp.zeros((1, D), jnp.float32)
    w_pt = 0.50 * jax.random.normal(ks[1], (3, D), jnp.float32)
    b_pt = jnp.zeros((1, D), jnp.float32)
    w_iou = 0.30 * jax.random.normal(ks[2], (D, M), jnp.float32)
    b_iou = jnp.full((1, M), 1.0, jnp.float32)        # bias so some IoU > 0.7
    w_mask = 0.10 * jax.random.normal(ks[3], (D, MS), jnp.float32)
    b_mask = jnp.full((1, MS), 2.0, jnp.float32)      # bias so stability > 0.9
    return (w_patch, b_patch, w_iou, b_iou, w_mask, b_mask), (w_pt, b_pt)


@jax.jit
def efficient_sam_embedder_forward(rgb_uint8, head_params, pt_params):
    # PyTorch: einops.rearrange('b h w c -> b c h w') then img.float()/255.
    # The per-batch mean pooling is commuted through the patch embedding, so
    # the kernel only needs the mean patch broadcast to the query rows.
    w_patch, b_patch, w_iou, b_iou, w_mask, b_mask = head_params

    mean_patch = patch_means(rgb_uint8)                              # (B, K)
    xk = jnp.repeat(mean_patch, NPTS, axis=0).astype(jnp.bfloat16)   # (B*NPTS, K)

    pt_emb = build_point_prompts(*pt_params)                         # (NPTS, D)
    ptb = jnp.tile(pt_emb, (B, 1)) + b_patch                         # bp folded in

    head_slab = build_head_slab(w_iou, b_iou, w_mask, b_mask)        # (40, 320)
    pe_slab = build_pe_slab(w_patch)                                 # (40, 192)

    packed = run_sam_head(xk, ptb, head_slab, pe_slab)               # (B*NPTS, 128)

    features = packed[:, :D].reshape(B, NPTS, D)
    pred_iou = packed[:, D:D + M].reshape(B, NPTS, M)
    stab = packed[:, D + M:D + 2 * M].reshape(B, NPTS, M)

    iou_out, feat_out = postprocess(pred_iou, stab, features)
    return {"segmentation_iou": iou_out,            # [B, NUM_QUERIES]
            "segmentation_features": feat_out}      # [B, NUM_QUERIES, D]


# --------------------------------- main ---------------------------------------
if __name__ == "__main__":
    key = jax.random.PRNGKey(0)
    k_img, k_par = jax.random.split(key)

    rgb_uint8 = jax.random.randint(k_img, (B, H, W, C), 0, 256,
                                   dtype=jnp.int32).astype(jnp.uint8)
    head_params, pt_params = init_params(k_par)

    out = efficient_sam_embedder_forward(rgb_uint8, head_params, pt_params)
    jax.block_until_ready(out)

    assert out["segmentation_iou"].shape == (B, NUM_QUERIES)
    assert out["segmentation_features"].shape == (B, NUM_QUERIES, D)
    print("KERNEL_OK")
</pallas_src>

<mosaic_0001>
module attributes {stable_mosaic.version = 11 : i64} {
  func.func @sam_fused_kernel(%arg0: memref<32x192xbf16, #tpu.memory_space<vmem>>, %arg1: memref<32x32xf32, #tpu.memory_space<vmem>>, %arg2: memref<40x320xbf16, #tpu.memory_space<vmem>>, %arg3: memref<40x192xbf16, #tpu.memory_space<vmem>>, %arg4: memref<32x128xf32, #tpu.memory_space<vmem>>) attributes {dimension_semantics = [], scalar_prefetch = 0 : i64, scratch_operands = 0 : i64, tpu.core_type = #tpu.core_type<tc>} {
    %c0 = arith.constant 0 : index
    %c0_0 = arith.constant 0 : index
    %0 = vector.load %arg3[%c0, %c0_0] : memref<40x192xbf16, #tpu.memory_space<vmem>>, vector<32x192xbf16>
    %c32 = arith.constant 32 : index
    %c0_1 = arith.constant 0 : index
    %1 = vector.load %arg3[%c32, %c0_1] : memref<40x192xbf16, #tpu.memory_space<vmem>>, vector<3x192xbf16>
    %c0_2 = arith.constant 0 : index
    %c0_3 = arith.constant 0 : index
    %2 = vector.load %arg2[%c0_2, %c0_3] : memref<40x320xbf16, #tpu.memory_space<vmem>>, vector<32x320xbf16>
    %c32_4 = arith.constant 32 : index
    %c0_5 = arith.constant 0 : index
    %3 = vector.load %arg2[%c32_4, %c0_5] : memref<40x320xbf16, #tpu.memory_space<vmem>>, vector<1x320xbf16>
    %4 = arith.extf %3 : vector<1x320xbf16> to vector<1x320xf32>
    %c0_6 = arith.constant 0 : index
    %c0_7 = arith.constant 0 : index
    %5 = vector.load %arg0[%c0_6, %c0_7] : memref<32x192xbf16, #tpu.memory_space<vmem>>, vector<32x192xbf16>
    %cst = arith.constant dense<0.000000e+00> : vector<32x32xf32>
    %6 = tpu.matmul %5, %0, %cst {dimension_numbers = #tpu.dot_dimension_numbers<[1], [1], [0], [0], [0, 0, 1, 0], [], []>} : vector<32x192xbf16>, vector<32x192xbf16>, vector<32x32xf32> -> vector<32x32xf32>
    %c0_8 = arith.constant 0 : index
    %c0_9 = arith.constant 0 : index
    %7 = vector.load %arg1[%c0_8, %c0_9] : memref<32x32xf32, #tpu.memory_space<vmem>>, vector<32x32xf32>
    %8 = arith.addf %7, %6 : vector<32x32xf32>
    %9 = math.tanh %8 : vector<32x32xf32>
    %10 = arith.truncf %9 : vector<32x32xf32> to vector<32x32xbf16>
    %cst_10 = arith.constant dense<0.000000e+00> : vector<32x320xf32>
    %11 = tpu.matmul %10, %2, %cst_10 {dimension_numbers = #tpu.dot_dimension_numbers<[1], [0], [0], [1], [0, 0, 1, 1], [], []>} : vector<32x32xbf16>, vector<32x320xbf16>, vector<32x320xf32> -> vector<32x320xf32>
    %12 = vector.broadcast %4 : vector<1x320xf32> to vector<32x320xf32>
    %13 = arith.addf %11, %12 : vector<32x320xf32>
    %14 = vector.extract_strided_slice %13 {offsets = [0, 0], sizes = [32, 3], strides = [1, 1]} : vector<32x320xf32> to vector<32x3xf32>
    %15 = vector.extract_strided_slice %13 {offsets = [0, 128], sizes = [32, 192], strides = [1, 1]} : vector<32x320xf32> to vector<32x192xf32>
    %cst_11 = arith.constant 1.000000e+00 : f32
    %16 = vector.broadcast %cst_11 : f32 to vector<32x192xf32>
    %17 = arith.cmpf ogt, %15, %16 : vector<32x192xf32>
    %cst_12 = arith.constant -1.000000e+00 : f32
    %18 = vector.broadcast %cst_12 : f32 to vector<32x192xf32>
    %19 = arith.cmpf ogt, %15, %18 : vector<32x192xf32>
    %20 = tpu.concatenate %17, %19 in 0 : vector<32x192xi1>, vector<32x192xi1> -> vector<64x192xi1>
    %21 = arith.extui %20 : vector<64x192xi1> to vector<64x192xi32>
    %22 = arith.sitofp %21 : vector<64x192xi32> to vector<64x192xf32>
    %23 = arith.truncf %22 : vector<64x192xf32> to vector<64x192xbf16>
    %cst_13 = arith.constant dense<0.000000e+00> : vector<64x3xf32>
    %24 = tpu.matmul %23, %1, %cst_13 {dimension_numbers = #tpu.dot_dimension_numbers<[1], [1], [0], [0], [0, 0, 1, 0], [], []>} : vector<64x192xbf16>, vector<3x192xbf16>, vector<64x3xf32> -> vector<64x3xf32>
    %25 = vector.extract_strided_slice %24 {offsets = [0, 0], sizes = [32, 3], strides = [1, 1]} : vector<64x3xf32> to vector<32x3xf32>
    %26 = vector.extract_strided_slice %24 {offsets = [32, 0], sizes = [32, 3], strides = [1, 1]} : vector<64x3xf32> to vector<32x3xf32>
    %cst_14 = arith.constant 1.000000e+00 : f32
    %27 = vector.broadcast %cst_14 : f32 to vector<32x3xf32>
    %28 = arith.maximumf %26, %27 : vector<32x3xf32>
    %29 = arith.divf %25, %28 : vector<32x3xf32>
    %cst_15 = arith.constant 0.000000e+00 : f32
    %30 = vector.broadcast %cst_15 : f32 to vector<32x90xf32>
    %31 = tpu.concatenate %9, %14, %29, %30 in 1 : vector<32x32xf32>, vector<32x3xf32>, vector<32x3xf32>, vector<32x90xf32> -> vector<32x128xf32>
    %c0_16 = arith.constant 0 : index
    %c0_17 = arith.constant 0 : index
    %32 = vector.load %arg4[%c0_16, %c0_17] : memref<32x128xf32, #tpu.memory_space<vmem>>, vector<32x128xf32>
    tpu.vector_store %arg4[%c0_16, %c0_17], %31 {strides = array<i32>} : memref<32x128xf32, #tpu.memory_space<vmem>>, vector<32x128xf32>,
    return
  }
}

</mosaic_0001>

<llo_original>
// kernel: efficient_sam_embedder_forward.1
$region0: #{efficient_sam_embedder_forward.1}
  #allocation0 [shape = 'u32[]', space=smem, size = 0x4, offset = 0x4, fixed_abs, tag = 'smem constant byte address 0x4 - core index']
  #allocation1 [shape = 'u32[72,128]{1,0:T(1,128)}', space=vmem, size = 0x9000, scoped, tag = 'internal scratch']
  %s0 = inlined_call_operand.vmem [shape: bf16[32,192], index: 0, kind: input, shape index: {}]
  %s1 = inlined_call_operand.vmem [shape: f32[32,32], index: 1, kind: input, shape index: {}]
  %s2 = inlined_call_operand.vmem [shape: bf16[40,320], index: 2, kind: input, shape index: {}]
  %s3 = inlined_call_operand.vmem [shape: bf16[40,192], index: 3, kind: input, shape index: {}]
  %s4 = inlined_call_operand.vmem [shape: f32[32,128], index: 4, kind: output, shape index: {}]
  %s5 = sld [smem:[#allocation0]]
  $region26: #{efficient_sam_embedder_forward.1} parent=0
    _
  %s7 = ssub.s32 1, %s5
  %s8 = scalar_select 0, %s7, %s5
  // Predicated region
  $region2: #{efficient_sam_embedder_forward.1} parent=0 // pred_check
    _
  $region3: #{efficient_sam_embedder_forward.1} parent=0 // pred_check_branch
    %10 = sbr.rel (0) target = $region5
  $region4: #{efficient_sam_embedder_forward.1} parent=0 // pred_region
    _
  $region5: #{efficient_sam_embedder_forward.1} parent=0 // pred_fallthru
    _
  // Predicated region
  $region6: #{efficient_sam_embedder_forward.1} parent=0 // pred_check
    _
  $region7: #{efficient_sam_embedder_forward.1} parent=0 // pred_check_branch
    %12 = sbr.rel (0) target = $region9
  $region8: #{efficient_sam_embedder_forward.1} parent=0 // pred_region
    _
  $region9: #{efficient_sam_embedder_forward.1} parent=0 // pred_fallthru
    _
  // Predicated region
  $region10: #{efficient_sam_embedder_forward.1} parent=0 // pred_check
    _
  $region11: #{efficient_sam_embedder_forward.1} parent=0 // pred_check_branch
    %14 = sbr.rel (0) target = $region13
  $region12: #{efficient_sam_embedder_forward.1} parent=0 // pred_region
    _
  $region13: #{efficient_sam_embedder_forward.1} parent=0 // pred_fallthru
    _
  // Predicated region
  $region14: #{efficient_sam_embedder_forward.1} parent=0 // pred_check
    _
  $region15: #{efficient_sam_embedder_forward.1} parent=0 // pred_check_branch
    %16 = sbr.rel (0) target = $region17
  $region16: #{efficient_sam_embedder_forward.1} parent=0 // pred_region
    _
  $region17: #{efficient_sam_embedder_forward.1} parent=0 // pred_fallthru
    _
  %v18 = vld [vmem:[%s3] sm:$0xff]
  %v19 = vld [vmem:[%s3 + $0x8] sm:$0xff]
  %v20 = vld [vmem:[%s3 + $0x10] sm:$0xff]
  %v21 = vld [vmem:[%s3 + $0x18] sm:$0xff]
  %v22 = vld [vmem:[%s3 + $0x20] sm:$0x33]
  %v23 = vld [vmem:[%s2] sm:$0xff]
  %v24 = vld [vmem:[%s2 + $0x8] sm:$0xf]
  %v25 = vld [vmem:[%s2 + $0xc] sm:$0xff]
  %v26 = vld [vmem:[%s2 + $0x14] sm:$0xf]
  %v27 = vld [vmem:[%s2 + $0x18] sm:$0xff]
  %v28 = vld [vmem:[%s2 + $0x20] sm:$0xf]
  %v29 = vld [vmem:[%s2 + $0x24] sm:$0xff]
  %v30 = vld [vmem:[%s2 + $0x2c] sm:$0xf]
  %v31 = vld [vmem:[%s2 + $0x30] sm:$0x11]
  %v32 = vld [vmem:[%s2 + $0x38] sm:$0x1]
  %v33 = vunpack.c.l.bf16 %v31
  %v34 = vunpack.c.h.bf16 %v31
  %v35 = vunpack.c.l.bf16 %v32
  %v36 = vld [vmem:[%s0] sm:$0xff]
  %v37 = vld [vmem:[%s0 + $0x8] sm:$0xff]
  %v38 = vld [vmem:[%s0 + $0x10] sm:$0xff]
  %v39 = vld [vmem:[%s0 + $0x18] sm:$0xff]
  %v44 = vunpack.c.l.b16 %v36
  %v45 = vunpack.c.h.b16 %v36
  %v46 = vunpack.c.l.b16 %v37
  %v47 = vunpack.c.h.b16 %v37
  %v48 = vunpack.c.l.b16 %v38
  %v49 = vunpack.c.h.b16 %v38
  %v50 = vunpack.c.l.b16 %v39
  %v51 = vunpack.c.h.b16 %v39
  %v52 = vpack.c.b16 %v46, %v44
  %v53 = vpack.c.b16 %v47, %v45
  %v54 = vpack.c.b16 %v50, %v48
  %v55 = vpack.c.b16 %v51, %v49
  %v62 = vunpack.c.l.b16 %v18
  %v63 = vunpack.c.h.b16 %v18
  %v64 = vunpack.c.l.b16 %v19
  %v65 = vunpack.c.h.b16 %v19
  %v66 = vunpack.c.l.b16 %v20
  %v67 = vunpack.c.h.b16 %v20
  %v68 = vunpack.c.l.b16 %v21
  %v69 = vunpack.c.h.b16 %v21
  %v70 = vpack.c.b16 %v64, %v62
  %v71 = vpack.c.b16 %v65, %v63
  %v72 = vpack.c.b16 %v68, %v66
  %v73 = vpack.c.b16 %v69, %v67
  %vm76 = vcmask 523264
  %v78 = vsel %vm76, %v53, 0
  %v81 = vsel %vm76, %v55, 0
  %v84 = vsel %vm76, %v71, 0
  %v87 = vsel %vm76, %v73, 0
  %89 = vmatpush.bf16.xpose.msra.mxu0 0
  %90 = vmatpush.bf16.xpose.msra.mxu0 0
  %91 = vmatpush.bf16.xpose.msra.mxu0 0
  %92 = vmatpush.bf16.xpose.msra.mxu0 0
  %93 = vmatpush.bf16.xpose.msra.mxu0 0
  %94 = vmatpush.bf16.xpose.msra.mxu0 0
  %95 = vmatpush.bf16.xpose.msra.mxu0 %v72
  %96 = vmatpush.bf16.xpose.msra.mxu0 %v70
  %97 = vmatmul.bf16.gmra.mxu0 %v52
  %v98 = vpop.f32.mrf.mxu0
  %v99 = vadd.f32 0.0, %v98
  %v100 = vpop.f32.mrf.mxu0
  %v101 = vadd.f32 0.0, %v100
  %102 = vmatmul.bf16.gmra.mxu0 %v54
  %v103 = vpop.f32.mrf.mxu0
  %v104 = vadd.f32 0.0, %v103
  %v105 = vpop.f32.mrf.mxu0
  %v106 = vadd.f32 0.0, %v105
  %107 = vdwg.mxu0
  %108 = vmatpush.bf16.xpose.msra.mxu0 0
  %109 = vmatpush.bf16.xpose.msra.mxu0 0
  %110 = vmatpush.bf16.xpose.msra.mxu0 0
  %111 = vmatpush.bf16.xpose.msra.mxu0 0
  %112 = vmatpush.bf16.xpose.msra.mxu0 0
  %113 = vmatpush.bf16.xpose.msra.mxu0 0
  %114 = vmatpush.bf16.xpose.msra.mxu0 %v87
  %115 = vmatpush.bf16.xpose.msra.mxu0 %v84
  %116 = vmatmul.bf16.gmra.mxu0 %v78
  %v117 = vpop.f32.mrf.mxu0
  %v118 = vadd.f32 %v99, %v117
  %v119 = vpop.f32.mrf.mxu0
  %v120 = vadd.f32 %v101, %v119
  %121 = vmatmul.bf16.gmra.mxu0 %v81
  %v122 = vpop.f32.mrf.mxu0
  %v123 = vadd.f32 %v104, %v122
  %v124 = vpop.f32.mrf.mxu0
  %v125 = vadd.f32 %v106, %v124
  %126 = vdwg.mxu0
  %v127 = vld [vmem:[%s1] sm:$0xff]
  %v128 = vld [vmem:[%s1 + $0x8] sm:$0xff]
  %v129 = vld [vmem:[%s1 + $0x10] sm:$0xff]
  %v130 = vld [vmem:[%s1 + $0x18] sm:$0xff]
  %v131 = vadd.f32 %v127, %v118
  %v132 = vadd.f32 %v128, %v120
  %v133 = vadd.f32 %v129, %v123
  %v134 = vadd.f32 %v130, %v125
  %v135 = vtanh.pop %v131
  %v136 = vtanh.pop %v132
  %v137 = vtanh.pop %v133
  %v138 = vtanh.pop %v134
  %v139 = vpack.c.bf16 %v136, %v135
  %v140 = vpack.c.bf16 %v138, %v137
  %v141 = vperm.slane %v33, 0
  %v142 = vperm.slane %v34, 0
  %v143 = vperm.slane %v35, 0
  %v152 = vunpack.c.l.b16 %v23
  %v153 = vunpack.c.h.b16 %v23
  %v154 = vunpack.c.l.b16 %v24
  %v155 = vunpack.c.l.b16 %v25
  %v156 = vunpack.c.h.b16 %v25
  %v157 = vunpack.c.l.b16 %v26
  %v158 = vunpack.c.l.b16 %v27
  %v159 = vunpack.c.h.b16 %v27
  %v160 = vunpack.c.l.b16 %v28
  %v161 = vunpack.c.l.b16 %v29
  %v162 = vunpack.c.h.b16 %v29
  %v163 = vunpack.c.l.b16 %v30
  %v164 = vpack.c.b16 %v155, %v152
  %v165 = vpack.c.b16 %v156, %v153
  %v166 = vpack.c.b16 %v157, %v154
  %v167 = vpack.c.b16 %v161, %v158
  %v168 = vpack.c.b16 %v162, %v159
  %v169 = vpack.c.b16 %v163, %v160
  %vm176 = vcmask 261120
  %v178 = vsel %vm176, %v139, 0
  %v181 = vsel %vm176, %v140, 0
  %183 = vmatpush.bf16.msra.mxu0 0
  %184 = vmatpush.bf16.msra.mxu0 0
  %185 = vmatpush.bf16.msra.mxu0 0
  %186 = vmatpush.bf16.msra.mxu0 0
  %187 = vmatpush.bf16.msra.mxu0 0
  %188 = vmatpush.bf16.msra.mxu0 0
  %189 = vmatpush.bf16.msra.mxu0 %v167
  %190 = vmatpush.bf16.msra.mxu0 %v164
  %191 = vmatmul.bf16.gmra.mxu0 %v178
  %v192 = vpop.f32.mrf.mxu0
  %v193 = vadd.f32 %v141, %v192
  %v194 = vpop.f32.mrf.mxu0
  %v195 = vadd.f32 %v141, %v194
  %196 = vmatmul.bf16.gmra.mxu0 %v181
  %v197 = vpop.f32.mrf.mxu0
  %v198 = vadd.f32 %v141, %v197
  %v199 = vpop.f32.mrf.mxu0
  %v200 = vadd.f32 %v141, %v199
  %201 = vdwg.mxu0
  %202 = vmatpush.bf16.msra.mxu0 0
  %203 = vmatpush.bf16.msra.mxu0 0
  %204 = vmatpush.bf16.msra.mxu0 0
  %205 = vmatpush.bf16.msra.mxu0 0
  %206 = vmatpush.bf16.msra.mxu0 0
  %207 = vmatpush.bf16.msra.mxu0 0
  %208 = vmatpush.bf16.msra.mxu0 %v168
  %209 = vmatpush.bf16.msra.mxu0 %v165
  %210 = vmatmul.bf16.gmra.mxu0 %v178
  %v211 = vpop.f32.mrf.mxu0
  %v212 = vadd.f32 %v142, %v211
  %v213 = vpop.f32.mrf.mxu0
  %v214 = vadd.f32 %v142, %v213
  %215 = vmatmul.bf16.gmra.mxu0 %v181
  %v216 = vpop.f32.mrf.mxu0
  %v217 = vadd.f32 %v142, %v216
  %v218 = vpop.f32.mrf.mxu0
  %v219 = vadd.f32 %v142, %v218
  %220 = vdwg.mxu0
  %221 = vmatpush.bf16.msra.mxu0 0
  %222 = vmatpush.bf16.msra.mxu0 0
  %223 = vmatpush.bf16.msra.mxu0 0
  %224 = vmatpush.bf16.msra.mxu0 0
  %225 = vmatpush.bf16.msra.mxu0 0
  %226 = vmatpush.bf16.msra.mxu0 0
  %227 = vmatpush.bf16.msra.mxu0 %v169
  %228 = vmatpush.bf16.msra.mxu0 %v166
  %229 = vmatmul.bf16.gmra.mxu0 %v178
  %v230 = vpop.f32.mrf.mxu0
  %v231 = vadd.f32 %v143, %v230
  %v232 = vpop.f32.mrf.mxu0
  %v233 = vadd.f32 %v143, %v232
  %234 = vmatmul.bf16.gmra.mxu0 %v181
  %v235 = vpop.f32.mrf.mxu0
  %v236 = vadd.f32 %v143, %v235
  %v237 = vpop.f32.mrf.mxu0
  %v238 = vadd.f32 %v143, %v237
  %239 = vdwg.mxu0
  %vm240 = vcmp.gt.f32.partialorder %v212, 1.0
  %vm241 = vcmp.gt.f32.partialorder %v231, 1.0
  %vm242 = vcmp.gt.f32.partialorder %v214, 1.0
  %vm243 = vcmp.gt.f32.partialorder %v233, 1.0
  %vm244 = vcmp.gt.f32.partialorder %v217, 1.0
  %vm245 = vcmp.gt.f32.partialorder %v236, 1.0
  %vm246 = vcmp.gt.f32.partialorder %v219, 1.0
  %vm247 = vcmp.gt.f32.partialorder %v238, 1.0
  %vm248 = vcmp.gt.f32.partialorder %v212, -1.0
  %vm249 = vcmp.gt.f32.partialorder %v231, -1.0
  %vm250 = vcmp.gt.f32.partialorder %v214, -1.0
  %vm251 = vcmp.gt.f32.partialorder %v233, -1.0
  %vm252 = vcmp.gt.f32.partialorder %v217, -1.0
  %vm253 = vcmp.gt.f32.partialorder %v236, -1.0
  %vm254 = vcmp.gt.f32.partialorder %v219, -1.0
  %vm255 = vcmp.gt.f32.partialorder %v238, -1.0
  %v256 = vsel %vm240, 1, 0
  %v257 = vsel %vm241, 1, 0
  %v258 = vsel %vm242, 1, 0
  %v259 = vsel %vm243, 1, 0
  %v260 = vsel %vm244, 1, 0
  %v261 = vsel %vm245, 1, 0
  %v262 = vsel %vm246, 1, 0
  %v263 = vsel %vm247, 1, 0
  %v264 = vsel %vm248, 1, 0
  %v265 = vsel %vm249, 1, 0
  %v266 = vsel %vm250, 1, 0
  %v267 = vsel %vm251, 1, 0
  %v268 = vsel %vm252, 1, 0
  %v269 = vsel %vm253, 1, 0
  %v270 = vsel %vm254, 1, 0
  %v271 = vsel %vm255, 1, 0
  %v272 = vcvt.s32.f32 %v256
  %v273 = vcvt.s32.f32 %v257
  %v274 = vcvt.s32.f32 %v258
  %v275 = vcvt.s32.f32 %v259
  %v276 = vcvt.s32.f32 %v260
  %v277 = vcvt.s32.f32 %v261
  %v278 = vcvt.s32.f32 %v262
  %v279 = vcvt.s32.f32 %v263
  %v280 = vcvt.s32.f32 %v264
  %v281 = vcvt.s32.f32 %v265
  %v282 = vcvt.s32.f32 %v266
  %v283 = vcvt.s32.f32 %v267
  %v284 = vcvt.s32.f32 %v268
  %v285 = vcvt.s32.f32 %v269
  %v286 = vcvt.s32.f32 %v270
  %v287 = vcvt.s32.f32 %v271
  %v288 = vpack.c.bf16 %v274, %v272
  %v289 = vpack.c.bf16 %v275, %v273
  %v290 = vpack.c.bf16 %v278, %v276
  %v291 = vpack.c.bf16 %v279, %v277
  %v292 = vpack.c.bf16 %v282, %v280
  %v293 = vpack.c.bf16 %v283, %v281
  %v294 = vpack.c.bf16 %v286, %v284
  %v295 = vpack.c.bf16 %v287, %v285
  %v297 = vunpack.c.l.b16 %v22
  %v298 = vunpack.c.h.b16 %v22
  %v299 = vpack.c.b16 %v297, %v297
  %v300 = vpack.c.b16 %v298, %v298
  %v303 = vsel %vm76, %v289, 0
  %v306 = vsel %vm76, %v291, 0
  %v309 = vsel %vm76, %v293, 0
  %v312 = vsel %vm76, %v295, 0
  %v315 = vsel %vm76, %v300, 0
  %317 = vmatpush.bf16.xpose.msra.mxu0 0
  %318 = vmatpush.bf16.xpose.msra.mxu0 0
  %319 = vmatpush.bf16.xpose.msra.mxu0 0
  %320 = vmatpush.bf16.xpose.msra.mxu0 0
  %321 = vmatpush.bf16.xpose.msra.mxu0 0
  %322 = vmatpush.bf16.xpose.msra.mxu0 0
  %323 = vmatpush.bf16.xpose.msra.mxu0 0
  %324 = vmatpush.bf16.xpose.msra.mxu0 %v299
  %325 = vmatmul.bf16.gmra.mxu0 %v288
  %v326 = vpop.f32.mrf.mxu0
  %v327 = vadd.f32 0.0, %v326
  %v328 = vpop.f32.mrf.mxu0
  %v329 = vadd.f32 0.0, %v328
  %330 = vmatmul.bf16.gmra.mxu0 %v290
  %v331 = vpop.f32.mrf.mxu0
  %v332 = vadd.f32 0.0, %v331
  %v333 = vpop.f32.mrf.mxu0
  %v334 = vadd.f32 0.0, %v333
  %335 = vmatmul.bf16.gmra.mxu0 %v292
  %v336 = vpop.f32.mrf.mxu0
  %v337 = vadd.f32 0.0, %v336
  %v338 = vpop.f32.mrf.mxu0
  %v339 = vadd.f32 0.0, %v338
  %340 = vmatmul.bf16.gmra.mxu0 %v294
  %v341 = vpop.f32.mrf.mxu0
  %v342 = vadd.f32 0.0, %v341
  %v343 = vpop.f32.mrf.mxu0
  %v344 = vadd.f32 0.0, %v343
  %345 = vdwg.mxu0
  %346 = vmatpush.bf16.xpose.msra.mxu0 0
  %347 = vmatpush.bf16.xpose.msra.mxu0 0
  %348 = vmatpush.bf16.xpose.msra.mxu0 0
  %349 = vmatpush.bf16.xpose.msra.mxu0 0
  %350 = vmatpush.bf16.xpose.msra.mxu0 0
  %351 = vmatpush.bf16.xpose.msra.mxu0 0
  %352 = vmatpush.bf16.xpose.msra.mxu0 0
  %353 = vmatpush.bf16.xpose.msra.mxu0 %v315
  %354 = vmatmul.bf16.gmra.mxu0 %v303
  %v355 = vpop.f32.mrf.mxu0
  %v356 = vadd.f32 %v327, %v355
  %v357 = vpop.f32.mrf.mxu0
  %v358 = vadd.f32 %v329, %v357
  %359 = vmatmul.bf16.gmra.mxu0 %v306
  %v360 = vpop.f32.mrf.mxu0
  %v361 = vadd.f32 %v332, %v360
  %v362 = vpop.f32.mrf.mxu0
  %v363 = vadd.f32 %v334, %v362
  %364 = vmatmul.bf16.gmra.mxu0 %v309
  %v365 = vpop.f32.mrf.mxu0
  %v366 = vadd.f32 %v337, %v365
  %v367 = vpop.f32.mrf.mxu0
  %v368 = vadd.f32 %v339, %v367
  %369 = vmatmul.bf16.gmra.mxu0 %v312
  %v370 = vpop.f32.mrf.mxu0
  %v371 = vadd.f32 %v342, %v370
  %v372 = vpop.f32.mrf.mxu0
  %v373 = vadd.f32 %v344, %v372
  %374 = vdwg.mxu0
  %v375 = vmax.f32 %v366, 1.0
  %v376 = vmax.f32 %v368, 1.0
  %v377 = vmax.f32 %v371, 1.0
  %v378 = vmax.f32 %v373, 1.0
  %v379 = vrcp.pop %v375
  %v380 = vmul.f32 %v375, %v379
  %v381 = vsub.f32 1.0, %v380
  %v382 = vmul.f32 %v379, %v381
  %v383 = vadd.f32 %v379, %v382
  %vm384 = vweird.f32 %v375
  %vm385 = vweird.f32 %v379
  %vm386 = vmor %vm384, %vm385
  %v387 = vsel %vm386, %v379, %v383
  %v388 = vand.u32 2147483647, %v375
  %vm389 = vcmp.eq.f32.partialorder %v388, 8.507059e+37
  %v390 = vand.u32 %v375, 2147483648
  %v391 = vor.u32 1.1754944e-38, %v390
  %v392 = vsel %vm389, %v391, %v387
  %v393 = vmul.f32 %v356, %v392
  %v394 = vrcp.pop %v376
  %v395 = vmul.f32 %v376, %v394
  %v396 = vsub.f32 1.0, %v395
  %v397 = vmul.f32 %v394, %v396
  %v398 = vadd.f32 %v394, %v397
  %vm399 = vweird.f32 %v376
  %vm400 = vweird.f32 %v394
  %vm401 = vmor %vm399, %vm400
  %v402 = vsel %vm401, %v394, %v398
  %v403 = vand.u32 2147483647, %v376
  %vm404 = vcmp.eq.f32.partialorder %v403, 8.507059e+37
  %v405 = vand.u32 %v376, 2147483648
  %v406 = vor.u32 1.1754944e-38, %v405
  %v407 = vsel %vm404, %v406, %v402
  %v408 = vmul.f32 %v358, %v407
  %v409 = vrcp.pop %v377
  %v410 = vmul.f32 %v377, %v409
  %v411 = vsub.f32 1.0, %v410
  %v412 = vmul.f32 %v409, %v411
  %v413 = vadd.f32 %v409, %v412
  %vm414 = vweird.f32 %v377
  %vm415 = vweird.f32 %v409
  %vm416 = vmor %vm414, %vm415
  %v417 = vsel %vm416, %v409, %v413
  %v418 = vand.u32 2147483647, %v377
  %vm419 = vcmp.eq.f32.partialorder %v418, 8.507059e+37
  %v420 = vand.u32 %v377, 2147483648
  %v421 = vor.u32 1.1754944e-38, %v420
  %v422 = vsel %vm419, %v421, %v417
  %v423 = vmul.f32 %v361, %v422
  %v424 = vrcp.pop %v378
  %v425 = vmul.f32 %v378, %v424
  %v426 = vsub.f32 1.0, %v425
  %v427 = vmul.f32 %v424, %v426
  %v428 = vadd.f32 %v424, %v427
  %vm429 = vweird.f32 %v378
  %vm430 = vweird.f32 %v424
  %vm431 = vmor %vm429, %vm430
  %v432 = vsel %vm431, %v424, %v428
  %v433 = vand.u32 2147483647, %v378
  %vm434 = vcmp.eq.f32.partialorder %v433, 8.507059e+37
  %v435 = vand.u32 %v378, 2147483648
  %v436 = vor.u32 1.1754944e-38, %v435
  %v437 = vsel %vm434, %v436, %v432
  %v438 = vmul.f32 %v363, %v437
  %443 = vrot.lane.b32.xlu0 %v193, 32
  %v444 = vpop.permute.xlu0 %443
  %445 = vrot.lane.b32.xlu0 %v195, 32
  %v446 = vpop.permute.xlu0 %445
  %447 = vrot.lane.b32.xlu0 %v198, 32
  %v448 = vpop.permute.xlu0 %447
  %449 = vrot.lane.b32.xlu0 %v200, 32
  %v450 = vpop.permute.xlu0 %449
  %459 = vrot.lane.b32.xlu0 %v393, 35
  %v460 = vpop.permute.xlu0 %459
  %461 = vrot.lane.b32.xlu0 %v408, 35
  %v462 = vpop.permute.xlu0 %461
  %463 = vrot.lane.b32.xlu0 %v423, 35
  %v464 = vpop.permute.xlu0 %463
  %465 = vrot.lane.b32.xlu0 %v438, 35
  %v466 = vpop.permute.xlu0 %465
  %v471 = vsel %vm176, %v135, %v444
  %v472 = vsel %vm176, %v136, %v446
  %v473 = vsel %vm176, %v137, %v448
  %v474 = vsel %vm176, %v138, %v450
  %vm475 = vcmask 285696
  %v476 = vsel %vm475, %v471, %v460
  %v477 = vsel %vm475, %v472, %v462
  %v478 = vsel %vm475, %v473, %v464
  %v479 = vsel %vm475, %v474, %v466
  %vm480 = vcmask 310272
  %v481 = vsel %vm480, %v476, 0.0
  %v482 = vsel %vm480, %v477, 0.0
  %v483 = vsel %vm480, %v478, 0.0
  %v484 = vsel %vm480, %v479, 0.0
  %485 = vst [vmem:[%s4] sm:$0xff] %v481
  %486 = vst [vmem:[%s4 + $0x8] sm:$0xff] %v482
  %487 = vst [vmem:[%s4 + $0x10] sm:$0xff] %v483
  %488 = vst [vmem:[%s4 + $0x18] sm:$0xff] %v484
  // Predicated region
  $region18: #{efficient_sam_embedder_forward.1} parent=0 // pred_check
    _
  $region19: #{efficient_sam_embedder_forward.1} parent=0 // pred_check_branch
    %490 = sbr.rel (0) target = $region21
  $region20: #{efficient_sam_embedder_forward.1} parent=0 // pred_region
    _
  $region21: #{efficient_sam_embedder_forward.1} parent=0 // pred_fallthru
    _
  // Predicated region
  $region22: #{efficient_sam_embedder_forward.1} parent=0 // pred_check
    _
  $region23: #{efficient_sam_embedder_forward.1} parent=0 // pred_check_branch
    %492 = sbr.rel (0) target = $region25
  $region24: #{efficient_sam_embedder_forward.1} parent=0 // pred_region
    _
  $region25: #{efficient_sam_embedder_forward.1} parent=0 // pred_fallthru
    _

</llo_original>
